<compile_context>
chip_gen: v7x
topology: tpu7x:2x2x1
jax: 0.10.0
libtpu: 0.0.40
codegen_flags: <defaults>
</compile_context>

<pallas_src>
import functools
import math

import jax
import jax.numpy as jnp
from jax import lax
from jax.experimental import pallas as pl
from jax.experimental.pallas import tpu as pltpu

_LANES = 128
_SUBLANES = 8
_CHUNK_ROWS = 64  # (64, 128) f32 chunk = 8 vregs per live intermediate


def _tpu_hw():
    """Best-effort (vmem_capacity_bytes, tensorcores_per_chip)."""
    vmem_cap = 128 << 20
    num_cores = 1
    try:
        info = pltpu.get_tpu_info()
        v = getattr(info, "vmem_capacity_bytes", None)
        if isinstance(v, int) and v > 0:
            vmem_cap = int(v)
        for name in ("num_tensorcores", "tensorcores_per_chip",
                     "num_tensor_cores", "tensor_cores_per_chip",
                     "num_cores_per_chip"):
            c = getattr(info, name, None)
            if isinstance(c, int) and c >= 1:
                num_cores = min(int(c), 2)
                break
    except Exception:
        pass
    return vmem_cap, num_cores


def _focal_block_kernel(pred_ref, gt_ref, out_ref, *,
                        scale, gamma, count, blocks_per_core, needs_mask,
                        chunk_rows):
    """One grid step: stream a (tile_rows, 128) slab, fold into (8,128) acc."""
    c = pl.program_id(0)
    i = pl.program_id(1)

    @pl.when(i == 0)
    def _():
        out_ref[...] = jnp.zeros_like(out_ref)

    tile_rows = pred_ref.shape[0]
    n_chunks = tile_rows // chunk_rows
    chunk_elems = chunk_rows * _LANES
    block_elems = tile_rows * _LANES

    global_block = c * blocks_per_core + i
    block_off = global_block * block_elems  # element offset of this block

    def accumulate(masked):
        def body(ck, carry):
            r0 = pl.multiple_of(ck * chunk_rows, chunk_rows)
            p = pred_ref[pl.ds(r0, chunk_rows), :].astype(jnp.float32)
            g = gt_ref[pl.ds(r0, chunk_rows), :].astype(jnp.float32)

            # pt = sum over the 2-channel one-hot concat == g*p + (1-g)*(1-p)
            pt = g * p + (1.0 - g) * (1.0 - p)

            # clip_by_tensor(pt, 1e-12, 1.0)
            pt_c = jnp.where(pt >= 1e-12, pt, jnp.float32(1e-12))
            pt_c = jnp.where(pt_c <= 1.0, pt_c, jnp.float32(1.0))

            one_minus_pt = 1.0 - pt
            gamma_f = float(gamma)
            if gamma_f.is_integer() and 0.0 <= gamma_f <= 16.0:
                n = int(gamma_f)
                if n == 0:
                    pow_term = jnp.ones_like(one_minus_pt)
                else:
                    pow_term = one_minus_pt
                    for _ in range(n - 1):
                        pow_term = pow_term * one_minus_pt
            else:
                pow_term = jnp.power(one_minus_pt, jnp.float32(gamma_f))

            # scale = -alpha / ln(2)  =>  scale * ln(pt) == -alpha * log2(pt)
            focal = (jnp.float32(scale) * pow_term) * jnp.log(pt_c)

            if masked:
                # Zero out elements past the valid count (ragged tail /
                # out-of-range block).  Select (not multiply) so NaN/Inf in
                # the unspecified region cannot leak into the accumulator.
                rem = count - (block_off + ck * chunk_elems)
                row_idx = lax.broadcasted_iota(jnp.int32,
                                               (chunk_rows, _LANES), 0)
                lane_idx = lax.broadcasted_iota(jnp.int32,
                                                (chunk_rows, _LANES), 1)
                local_idx = row_idx * _LANES + lane_idx
                focal = jnp.where(local_idx < rem, focal, jnp.float32(0.0))

            # Fold (chunk_rows, 128) -> (8, 128): pure VALU vreg adds.
            partial = focal.reshape(chunk_rows // _SUBLANES,
                                    _SUBLANES, _LANES).sum(axis=0)
            out_ref[...] += partial
            return carry

        lax.fori_loop(0, n_chunks, body, 0)

    if not needs_mask:
        accumulate(False)
    else:
        is_full = (block_off + block_elems) <= count

        @pl.when(is_full)
        def _():
            accumulate(False)

        @pl.when(jnp.logical_not(is_full))
        def _():
            accumulate(True)


def focal_loss_pallas(pred, gt, alpha=0.25, gamma=2.0, size_average=True,
                      max_tile_rows=8192, num_cores=None):
    assert pred.shape == gt.shape and pred.shape[1] == 1
    N, C, H, W = pred.shape
    count = N * H * W  # focal_map has shape (N, H, W) after the channel sum

    vmem_cap, hw_cores = _tpu_hw()
    if num_cores is None:
        num_cores = hw_cores
    num_cores = max(1, int(num_cores))

    # Lane-dense layout: reshape (free, no copy) to (rows, 128).
    p_flat = pred.reshape(-1)
    g_flat = gt.reshape(-1)
    if count % _LANES != 0:
        # TODO(synk): non-128-divisible counts still pad (one HBM copy); a
        # manual-DMA (memory_space=pl.ANY) path would remove it entirely.
        pad = _LANES - count % _LANES
        p_flat = jnp.pad(p_flat, (0, pad))
        g_flat = jnp.pad(g_flat, (0, pad))
    rows = p_flat.shape[0] // _LANES
    p2 = p_flat.reshape(rows, _LANES)
    g2 = g_flat.reshape(rows, _LANES)

    # Tile sizing, gated on this generation's VMEM: 2 inputs x 2 pipeline
    # buffers x block must stay well under capacity (<= cap/4, <= 32 MiB).
    itemsize = max(jnp.dtype(p2.dtype).itemsize, jnp.dtype(g2.dtype).itemsize)
    budget = min(vmem_cap // 4, 32 << 20)
    cap_rows = max(_SUBLANES, budget // (2 * 2 * _LANES * itemsize))
    rows_up = ((rows + _SUBLANES - 1) // _SUBLANES) * _SUBLANES
    tile_rows = min(int(max_tile_rows), int(cap_rows), rows_up)
    tile_rows = max(_SUBLANES, (tile_rows // _SUBLANES) * _SUBLANES)
    if tile_rows >= _CHUNK_ROWS:
        tile_rows = (tile_rows // _CHUNK_ROWS) * _CHUNK_ROWS
    chunk_rows = min(_CHUNK_ROWS, tile_rows)

    blocks_total = -(-rows // tile_rows)
    scale = -float(alpha) / math.log(2.0)

    def _run(ncores):
        ncores = max(1, min(ncores, blocks_total))
        bpc = -(-blocks_total // ncores)
        # Mask path is compiled in only if any block can contain invalid
        # elements (ragged rows / ragged blocks / core ceil-rounding).
        needs_mask = (ncores * bpc * tile_rows * _LANES != count)

        kernel = functools.partial(
            _focal_block_kernel, scale=scale, gamma=gamma, count=count,
            blocks_per_core=bpc, needs_mask=needs_mask, chunk_rows=chunk_rows)

        def in_map(c, i):
            # Clamp so ceil-rounded (c, i) steps stay in bounds; their
            # contribution is zeroed by the in-kernel mask.
            return (jnp.minimum(c * bpc + i, blocks_total - 1), 0)

        if ncores > 1:
            dim_sem = (pltpu.CORE_PARALLEL, pltpu.ARBITRARY)
        else:
            dim_sem = ("arbitrary", "arbitrary")

        in_bytes = (jnp.dtype(p2.dtype).itemsize +
                    jnp.dtype(g2.dtype).itemsize)
        pipeline_bytes = 2 * tile_rows * _LANES * in_bytes  # 2 bufs / input
        vmem_needed = (pipeline_bytes
                       + 2 * ncores * _SUBLANES * _LANES * 4 + (2 << 20))
        vmem_limit = int(min(max(vmem_needed, 8 << 20), int(vmem_cap * 0.8)))

        return pl.pallas_call(
            kernel,
            out_shape=jax.ShapeDtypeStruct((ncores, _SUBLANES, _LANES),
                                           jnp.float32),
            grid_spec=pltpu.PrefetchScalarGridSpec(
                num_scalar_prefetch=0,
                grid=(ncores, bpc),
                in_specs=[
                    pl.BlockSpec((tile_rows, _LANES), in_map),
                    pl.BlockSpec((tile_rows, _LANES), in_map),
                ],
                out_specs=pl.BlockSpec((None, _SUBLANES, _LANES),
                                       lambda c, i: (c, 0, 0)),
            ),
            compiler_params=pltpu.CompilerParams(
                dimension_semantics=dim_sem,
                vmem_limit_bytes=vmem_limit),
        )(p2, g2)

    try:
        partials = _run(num_cores)
    except Exception:
        if num_cores > 1:
            partials = _run(1)  # safe single-core fallback
        else:
            raise

    total = partials.sum()  # tiny (<= 2*8*128) reduce in plain JAX
    if size_average:
        return total / jnp.float32(count)
    return total


def focal_loss_ref(pred, gt, alpha=0.25, gamma=2.0, size_average=True):
    # Pure-JAX reference mirroring the PyTorch forward.
    def clip_by_tensor(t, t_min, t_max):
        r = jnp.where(t >= t_min, t, t_min)
        r = jnp.where(r <= t_max, r, t_max)
        return r

    pred_oh = jnp.concatenate((pred, 1.0 - pred), axis=1)
    gt_oh = jnp.concatenate((gt, 1.0 - gt), axis=1)
    pt = (gt_oh * pred_oh).sum(1)
    pt_clipped = clip_by_tensor(pt, 1e-12, 1.0)
    focal_map = (-alpha * jnp.power(1.0 - pt, gamma)
                 * (jnp.log(pt_clipped) / jnp.log(2.0)))
    return focal_map.mean() if size_average else focal_map.sum()


if __name__ == "__main__":
    key = jax.random.PRNGKey(0)
    k1, k2 = jax.random.split(key)
    N, C, H, W = 2, 1, 16, 16
    # pred in (0,1) like sigmoid outputs, gt as binary mask
    pred = jax.nn.sigmoid(jax.random.normal(k1, (N, C, H, W), dtype=jnp.float32))
    gt = (jax.random.uniform(k2, (N, C, H, W)) > 0.5).astype(jnp.float32)

    loss = focal_loss_pallas(pred, gt)
    loss = jax.block_until_ready(loss)

    ref = focal_loss_ref(pred, gt)
    assert jnp.allclose(loss, ref, rtol=1e-5, atol=1e-6), (loss, ref)

    # also check sum-reduction path
    loss_sum = jax.block_until_ready(
        focal_loss_pallas(pred, gt, size_average=False))
    ref_sum = focal_loss_ref(pred, gt, size_average=False)
    assert jnp.allclose(loss_sum, ref_sum, rtol=1e-5, atol=1e-5), (loss_sum,
                                                                   ref_sum)

    print("KERNEL_OK")
</pallas_src>

<mosaic_0001>
module attributes {stable_mosaic.version = 11 : i64} {
  func.func @_focal_block_kernel(%arg0: i32, %arg1: i32, %arg2: memref<8x128xf32, #tpu.memory_space<vmem>>, %arg3: memref<8x128xf32, #tpu.memory_space<vmem>>, %arg4: memref<1x8x128xf32, #tpu.memory_space<vmem>>) attributes {dimension_semantics = [#tpu.dimension_semantics<arbitrary>, #tpu.dimension_semantics<arbitrary>], iteration_bounds = array<i64: 1, 1>, scalar_prefetch = 0 : i64, scratch_operands = 0 : i64, tpu.core_type = #tpu.core_type<tc>, window_params = [{transform_indices = @transform_0, window_bounds = array<i64: 8, 128>}, {transform_indices = @transform_1, window_bounds = array<i64: 8, 128>}, {transform_indices = @transform_2, window_bounds = array<i64: 1, 8, 128>}]} {
    %c0_i32 = arith.constant 0 : i32
    %0 = arith.cmpi eq, %arg1, %c0_i32 : i32
    %1 = arith.extui %0 : i1 to i32
    %c0_i32_0 = arith.constant 0 : i32
    %2 = arith.cmpi ne, %1, %c0_i32_0 : i32
    scf.if %2 {
      %cst = arith.constant 0.000000e+00 : f32
      %13 = vector.broadcast %cst : f32 to vector<8x128xf32>
      %c0 = arith.constant 0 : index
      %c0_4 = arith.constant 0 : index
      %c0_5 = arith.constant 0 : index
      %14 = vector.load %arg4[%c0, %c0_4, %c0_5] : memref<1x8x128xf32, #tpu.memory_space<vmem>>, vector<1x8x128xf32>
      %15 = vector.shape_cast %14 : vector<1x8x128xf32> to vector<8x128xf32>
      %16 = vector.shape_cast %13 : vector<8x128xf32> to vector<1x8x128xf32>
      tpu.vector_store %arg4[%c0, %c0_4, %c0_5], %16 {strides = array<i32>} : memref<1x8x128xf32, #tpu.memory_space<vmem>>, vector<1x8x128xf32>,
    } else {
    }
    %c1_i32 = arith.constant 1 : i32
    %3 = arith.muli %arg0, %c1_i32 : i32
    %4 = arith.addi %3, %arg1 : i32
    %c1024_i32 = arith.constant 1024 : i32
    %5 = arith.muli %4, %c1024_i32 : i32
    %c1024_i32_1 = arith.constant 1024 : i32
    %6 = arith.addi %5, %c1024_i32_1 : i32
    %c512_i32 = arith.constant 512 : i32
    %7 = arith.cmpi sle, %6, %c512_i32 : i32
    %8 = arith.extui %7 : i1 to i32
    %c0_i32_2 = arith.constant 0 : i32
    %9 = arith.cmpi ne, %8, %c0_i32_2 : i32
    scf.if %9 {
      %c0_i32_4 = arith.constant 0 : i32
      %c8_i32 = arith.constant 8 : i32
      %13 = arith.muli %c0_i32_4, %c8_i32 : i32
      %14 = tpu.assume_multiple %13, 8 : i32
      %15 = arith.index_cast %14 : i32 to index
      %c0 = arith.constant 0 : index
      %16 = vector.load %arg2[%15, %c0] : memref<8x128xf32, #tpu.memory_space<vmem>>, vector<8x128xf32>
      %17 = arith.index_cast %14 : i32 to index
      %c0_5 = arith.constant 0 : index
      %18 = vector.load %arg3[%17, %c0_5] : memref<8x128xf32, #tpu.memory_space<vmem>>, vector<8x128xf32>
      %19 = arith.mulf %18, %16 : vector<8x128xf32>
      %cst = arith.constant 1.000000e+00 : f32
      %20 = vector.broadcast %cst : f32 to vector<8x128xf32>
      %21 = arith.subf %20, %18 : vector<8x128xf32>
      %cst_6 = arith.constant 1.000000e+00 : f32
      %22 = vector.broadcast %cst_6 : f32 to vector<8x128xf32>
      %23 = arith.subf %22, %16 : vector<8x128xf32>
      %24 = arith.mulf %21, %23 : vector<8x128xf32>
      %25 = arith.addf %19, %24 : vector<8x128xf32>
      %cst_7 = arith.constant 9.99999996E-13 : f32
      %26 = vector.broadcast %cst_7 : f32 to vector<8x128xf32>
      %27 = arith.cmpf oge, %25, %26 : vector<8x128xf32>
      %cst_8 = arith.constant 9.99999996E-13 : f32
      %28 = vector.broadcast %cst_8 : f32 to vector<8x128xf32>
      %29 = arith.select %27, %25, %28 : vector<8x128xi1>, vector<8x128xf32>
      %cst_9 = arith.constant 1.000000e+00 : f32
      %30 = vector.broadcast %cst_9 : f32 to vector<8x128xf32>
      %31 = arith.cmpf ole, %29, %30 : vector<8x128xf32>
      %cst_10 = arith.constant 1.000000e+00 : f32
      %32 = vector.broadcast %cst_10 : f32 to vector<8x128xf32>
      %33 = arith.select %31, %29, %32 : vector<8x128xi1>, vector<8x128xf32>
      %cst_11 = arith.constant 1.000000e+00 : f32
      %34 = vector.broadcast %cst_11 : f32 to vector<8x128xf32>
      %35 = arith.subf %34, %25 : vector<8x128xf32>
      %36 = arith.mulf %35, %35 : vector<8x128xf32>
      %cst_12 = arith.constant -0.360673755 : f32
      %37 = vector.broadcast %cst_12 : f32 to vector<8x128xf32>
      %38 = arith.mulf %37, %36 : vector<8x128xf32>
      %39 = math.log %33 : vector<8x128xf32>
      %40 = arith.mulf %38, %39 : vector<8x128xf32>
      %41 = vector.shape_cast %40 : vector<8x128xf32> to vector<1x8x128xf32>
      %cst_13 = arith.constant dense<0.000000e+00> : vector<8x128xf32>
      %42 = vector.multi_reduction <add>, %41, %cst_13 [0] : vector<1x8x128xf32> to vector<8x128xf32>
      %c0_14 = arith.constant 0 : index
      %c0_15 = arith.constant 0 : index
      %c0_16 = arith.constant 0 : index
      %43 = vector.load %arg4[%c0_14, %c0_15, %c0_16] : memref<1x8x128xf32, #tpu.memory_space<vmem>>, vector<1x8x128xf32>
      %44 = vector.shape_cast %43 : vector<1x8x128xf32> to vector<8x128xf32>
      %45 = arith.addf %44, %42 : vector<8x128xf32>
      %c0_17 = arith.constant 0 : index
      %c0_18 = arith.constant 0 : index
      %c0_19 = arith.constant 0 : index
      %46 = vector.load %arg4[%c0_17, %c0_18, %c0_19] : memref<1x8x128xf32, #tpu.memory_space<vmem>>, vector<1x8x128xf32>
      %47 = vector.shape_cast %46 : vector<1x8x128xf32> to vector<8x128xf32>
      %48 = vector.shape_cast %45 : vector<8x128xf32> to vector<1x8x128xf32>
      tpu.vector_store %arg4[%c0_17, %c0_18, %c0_19], %48 {strides = array<i32>} : memref<1x8x128xf32, #tpu.memory_space<vmem>>, vector<1x8x128xf32>,
      %c1_i32_20 = arith.constant 1 : i32
    } else {
    }
    %true = arith.constant true
    %10 = arith.xori %7, %true : i1
    %11 = arith.extui %10 : i1 to i32
    %c0_i32_3 = arith.constant 0 : i32
    %12 = arith.cmpi ne, %11, %c0_i32_3 : i32
    scf.if %12 {
      %c0_i32_4 = arith.constant 0 : i32
      %c8_i32 = arith.constant 8 : i32
      %13 = arith.muli %c0_i32_4, %c8_i32 : i32
      %14 = tpu.assume_multiple %13, 8 : i32
      %15 = arith.index_cast %14 : i32 to index
      %c0 = arith.constant 0 : index
      %16 = vector.load %arg2[%15, %c0] : memref<8x128xf32, #tpu.memory_space<vmem>>, vector<8x128xf32>
      %17 = arith.index_cast %14 : i32 to index
      %c0_5 = arith.constant 0 : index
      %18 = vector.load %arg3[%17, %c0_5] : memref<8x128xf32, #tpu.memory_space<vmem>>, vector<8x128xf32>
      %19 = arith.mulf %18, %16 : vector<8x128xf32>
      %cst = arith.constant 1.000000e+00 : f32
      %20 = vector.broadcast %cst : f32 to vector<8x128xf32>
      %21 = arith.subf %20, %18 : vector<8x128xf32>
      %cst_6 = arith.constant 1.000000e+00 : f32
      %22 = vector.broadcast %cst_6 : f32 to vector<8x128xf32>
      %23 = arith.subf %22, %16 : vector<8x128xf32>
      %24 = arith.mulf %21, %23 : vector<8x128xf32>
      %25 = arith.addf %19, %24 : vector<8x128xf32>
      %cst_7 = arith.constant 9.99999996E-13 : f32
      %26 = vector.broadcast %cst_7 : f32 to vector<8x128xf32>
      %27 = arith.cmpf oge, %25, %26 : vector<8x128xf32>
      %cst_8 = arith.constant 9.99999996E-13 : f32
      %28 = vector.broadcast %cst_8 : f32 to vector<8x128xf32>
      %29 = arith.select %27, %25, %28 : vector<8x128xi1>, vector<8x128xf32>
      %cst_9 = arith.constant 1.000000e+00 : f32
      %30 = vector.broadcast %cst_9 : f32 to vector<8x128xf32>
      %31 = arith.cmpf ole, %29, %30 : vector<8x128xf32>
      %cst_10 = arith.constant 1.000000e+00 : f32
      %32 = vector.broadcast %cst_10 : f32 to vector<8x128xf32>
      %33 = arith.select %31, %29, %32 : vector<8x128xi1>, vector<8x128xf32>
      %cst_11 = arith.constant 1.000000e+00 : f32
      %34 = vector.broadcast %cst_11 : f32 to vector<8x128xf32>
      %35 = arith.subf %34, %25 : vector<8x128xf32>
      %36 = arith.mulf %35, %35 : vector<8x128xf32>
      %cst_12 = arith.constant -0.360673755 : f32
      %37 = vector.broadcast %cst_12 : f32 to vector<8x128xf32>
      %38 = arith.mulf %37, %36 : vector<8x128xf32>
      %39 = math.log %33 : vector<8x128xf32>
      %40 = arith.mulf %38, %39 : vector<8x128xf32>
      %c1024_i32_13 = arith.constant 1024 : i32
      %41 = arith.muli %c0_i32_4, %c1024_i32_13 : i32
      %42 = arith.addi %5, %41 : i32
      %c512_i32_14 = arith.constant 512 : i32
      %43 = arith.subi %c512_i32_14, %42 : i32
      %44 = tpu.iota {dimensions = array<i32: 0>} : vector<8x128xi32>
      %45 = tpu.iota {dimensions = array<i32: 1>} : vector<8x128xi32>
      %c128_i32 = arith.constant 128 : i32
      %46 = vector.broadcast %c128_i32 : i32 to vector<8x128xi32>
      %47 = arith.muli %44, %46 : vector<8x128xi32>
      %48 = arith.addi %47, %45 : vector<8x128xi32>
      %49 = vector.broadcast %43 : i32 to vector<8x128xi32>
      %50 = arith.cmpi slt, %48, %49 : vector<8x128xi32>
      %cst_15 = arith.constant 0.000000e+00 : f32
      %51 = vector.broadcast %cst_15 : f32 to vector<8x128xf32>
      %52 = arith.select %50, %40, %51 : vector<8x128xi1>, vector<8x128xf32>
      %53 = vector.shape_cast %52 : vector<8x128xf32> to vector<1x8x128xf32>
      %cst_16 = arith.constant dense<0.000000e+00> : vector<8x128xf32>
      %54 = vector.multi_reduction <add>, %53, %cst_16 [0] : vector<1x8x128xf32> to vector<8x128xf32>
      %c0_17 = arith.constant 0 : index
      %c0_18 = arith.constant 0 : index
      %c0_19 = arith.constant 0 : index
      %55 = vector.load %arg4[%c0_17, %c0_18, %c0_19] : memref<1x8x128xf32, #tpu.memory_space<vmem>>, vector<1x8x128xf32>
      %56 = vector.shape_cast %55 : vector<1x8x128xf32> to vector<8x128xf32>
      %57 = arith.addf %56, %54 : vector<8x128xf32>
      %c0_20 = arith.constant 0 : index
      %c0_21 = arith.constant 0 : index
      %c0_22 = arith.constant 0 : index
      %58 = vector.load %arg4[%c0_20, %c0_21, %c0_22] : memref<1x8x128xf32, #tpu.memory_space<vmem>>, vector<1x8x128xf32>
      %59 = vector.shape_cast %58 : vector<1x8x128xf32> to vector<8x128xf32>
      %60 = vector.shape_cast %57 : vector<8x128xf32> to vector<1x8x128xf32>
      tpu.vector_store %arg4[%c0_20, %c0_21, %c0_22], %60 {strides = array<i32>} : memref<1x8x128xf32, #tpu.memory_space<vmem>>, vector<1x8x128xf32>,
      %c1_i32_23 = arith.constant 1 : i32
    } else {
    }
    return
  }
  func.func @transform_0(%arg0: i32, %arg1: i32) -> (i32, i32) {
    %c1_i32 = arith.constant 1 : i32
    %0 = arith.muli %arg0, %c1_i32 : i32
    %1 = arith.addi %0, %arg1 : i32
    %c0_i32 = arith.constant 0 : i32
    %2 = arith.minsi %1, %c0_i32 : i32
    %c0_i32_0 = arith.constant 0 : i32
    %c0_i32_1 = arith.constant 0 : i32
    return %2, %c0_i32_0 : i32, i32
  }
  func.func @transform_1(%arg0: i32, %arg1: i32) -> (i32, i32) {
    %c1_i32 = arith.constant 1 : i32
    %0 = arith.muli %arg0, %c1_i32 : i32
    %1 = arith.addi %0, %arg1 : i32
    %c0_i32 = arith.constant 0 : i32
    %2 = arith.minsi %1, %c0_i32 : i32
    %c0_i32_0 = arith.constant 0 : i32
    %c0_i32_1 = arith.constant 0 : i32
    return %2, %c0_i32_0 : i32, i32
  }
  func.func @transform_2(%arg0: i32, %arg1: i32) -> (i32, i32, i32) {
    %c0_i32 = arith.constant 0 : i32
    %c0_i32_0 = arith.constant 0 : i32
    %c0_i32_1 = arith.constant 0 : i32
    return %arg0, %c0_i32, %c0_i32_0 : i32, i32, i32
  }
}

</mosaic_0001>

<llo_original>
// kernel: tpu_custom_call.1
$region0: #{tpu_custom_call.1}
  #allocation0 [shape = 'u32[]', space=smem, size = 0x4, offset = 0x4, fixed_abs, tag = 'smem constant byte address 0x4 - core index']
  #allocation1 [shape = 'u32[144,128]{1,0:T(1,128)}', space=vmem, size = 0x12000, scoped, tag = 'internal scratch']
  %s0 = inlined_call_operand.hbm [shape: f32[4,128], index: 0, kind: input, shape index: {}]
  %s1 = inlined_call_operand.hbm [shape: f32[4,128], index: 1, kind: input, shape index: {}]
  %s2 = inlined_call_operand.hbm [shape: f32[1,8,128], index: 2, kind: output, shape index: {}]
  %s3 = sld [smem:[#allocation0]]
  $region38: #{tpu_custom_call.1} parent=0
    _
  %s5 = ssub.s32 1, %s3
  %s6 = scalar_select 0, %s5, %s3
  $region1: #{tpu_custom_call.1} parent=0
    #allocation2 [shape = 'u8[4096]{0}', space=vmem, size = 0x1000, scoped, tag = 'input window, operand 0, single buffered']
    #allocation3 [shape = 's32[1]{0}', space=sflag, size = 0x4, scoped, tag = 'scoped memory for tpu_custom_call.1']
    #allocation4 [shape = 's32[1]{0}', space=sflag, size = 0x4, scoped, tag = 'scoped memory for tpu_custom_call.1']
    #allocation5 [shape = 'u8[4096]{0}', space=vmem, size = 0x1000, scoped, tag = 'input window, operand 1, single buffered']
    #allocation6 [shape = 's32[1]{0}', space=sflag, size = 0x4, scoped, tag = 'scoped memory for tpu_custom_call.1']
    #allocation7 [shape = 'u8[4096]{0}', space=vmem, size = 0x1000, scoped, tag = 'output window, operand 0, single buffered']
    %7 = vsyncpa [#allocation3], 0
    %8 = vsyncpa [#allocation6], 0
    %9 = vsyncpa [#allocation4], 0
    // Predicated region
    $region2: #{tpu_custom_call.1} parent=1 // pred_check
      _
    $region3: #{tpu_custom_call.1} parent=1 // pred_check_branch
      %11 = sbr.rel (0) target = $region5
    $region4: #{tpu_custom_call.1} parent=1 // pred_region
      %s12 = sadd.s32 0, 0
      %p13 = scmp.lt.s32.totalorder %s12, 0
      %s14 = scalar_select %p13, %s12, 0
      %s15 = smul.u32 2, %s14
      %s16 = ssub.s32 1, %s15
      %s17 = smul.u32 64, %s16
      %s19 = ssub.s32 128, %s17
      %20 = vsyncadd [#allocation3], %s19
      %p21 = scmp.ne.s32.totalorder 0, %s17
      %s22 = smul.addr %s15, 64
      %s23 = scalar_lea.hbm %s0, %s22
      %s24 = smul.u32 4, %s16
      %s25 = sshll.u32 [#allocation2], 4
      %s26 = int_to_ptr.vmem [resolvable:$true] %s25
      %s27 = sshll.u32 %s24, 4
      %31 = dma.hbm_to_vmem [thread:$0]  (%p21), %s23, %s27, %s26, [#allocation3], 64, 64, 4
    $region5: #{tpu_custom_call.1} parent=1 // pred_fallthru
      _
    // Predicated region
    $region6: #{tpu_custom_call.1} parent=1 // pred_check
      _
    $region7: #{tpu_custom_call.1} parent=1 // pred_check_branch
      %33 = sbr.rel (0) target = $region9
    $region8: #{tpu_custom_call.1} parent=1 // pred_region
      %s34 = sadd.s32 0, 0
      %p35 = scmp.lt.s32.totalorder %s34, 0
      %s36 = scalar_select %p35, %s34, 0
      %s37 = smul.u32 2, %s36
      %s38 = ssub.s32 1, %s37
      %s39 = smul.u32 64, %s38
      %s41 = ssub.s32 128, %s39
      %42 = vsyncadd [#allocation6], %s41
      %p43 = scmp.ne.s32.totalorder 0, %s39
      %s44 = smul.addr %s37, 64
      %s45 = scalar_lea.hbm %s1, %s44
      %s46 = smul.u32 4, %s38
      %s47 = sshll.u32 [#allocation5], 4
      %s48 = int_to_ptr.vmem [resolvable:$true] %s47
      %s49 = sshll.u32 %s46, 4
      %53 = dma.hbm_to_vmem [thread:$0]  (%p43), %s45, %s49, %s48, [#allocation6], 64, 64, 4
    $region9: #{tpu_custom_call.1} parent=1 // pred_fallthru
      _
    // Predicated region
    $region10: #{tpu_custom_call.1} parent=1 // pred_check
      _
    $region11: #{tpu_custom_call.1} parent=1 // pred_check_branch
      %55 = sbr.rel (0) target = $region13
    $region12: #{tpu_custom_call.1} parent=1 // pred_region
      %56 = dma.done [#allocation3], 128
    $region13: #{tpu_custom_call.1} parent=1 // pred_fallthru
      _
    // Predicated region
    $region14: #{tpu_custom_call.1} parent=1 // pred_check
      _
    $region15: #{tpu_custom_call.1} parent=1 // pred_check_branch
      %58 = sbr.rel (0) target = $region17
    $region16: #{tpu_custom_call.1} parent=1 // pred_region
      %59 = dma.done [#allocation6], 128
    $region17: #{tpu_custom_call.1} parent=1 // pred_fallthru
      _
    %s60 = sadd.s32 0, 0
    %p61 = scmp.lt.s32.totalorder %s60, 0
    %s62 = scalar_select %p61, %s60, 0
    %s63 = smul.u32 2, %s62
    %s64 = ssub.s32 1, %s63
    %s65 = smul.u32 64, %s64
    %s66 = sadd.s32 0, 0
    %p67 = scmp.lt.s32.totalorder %s66, 0
    %s68 = scalar_select %p67, %s66, 0
    %s69 = smul.u32 2, %s68
    %s70 = ssub.s32 1, %s69
    %s71 = smul.u32 64, %s70
    %p72 = scmp.eq.s32.totalorder 0, 0
    // Predicated region
    $region18: #{tpu_custom_call.1} parent=1 // pred_check
      %p73 = pneg %p72
    $region19: #{tpu_custom_call.1} parent=1 // pred_check_branch
      %75 = sbr.rel (%p73) target = $region21
    $region20: #{tpu_custom_call.1} parent=1 // pred_region
      %76 = vst [vmem:[#allocation7] sm:$0xff] 0.0
    $region21: #{tpu_custom_call.1} parent=1 // pred_fallthru
      _
    %s77 = sadd.s32 0, 0
    %s78 = smul.u32 %s77, 1024
    %s79 = sadd.s32 %s78, 1024
    %p80 = scmp.le.s32.totalorder %s79, 512
    // Predicated region
    $region22: #{tpu_custom_call.1} parent=1 // pred_check
      %p81 = pneg %p80
    $region23: #{tpu_custom_call.1} parent=1 // pred_check_branch
      %83 = sbr.rel (%p81) target = $region25
    $region24: #{tpu_custom_call.1} parent=1 // pred_region
      %v84 = vld [vmem:[#allocation2] sm:$0xff]
      %v85 = vld [vmem:[#allocation5] sm:$0xff]
      %v86 = vmul.f32 %v85, %v84
      %v87 = vsub.f32 1.0, %v85
      %v88 = vsub.f32 1.0, %v84
      %v89 = vmul.f32 %v87, %v88
      %v90 = vadd.f32 %v86, %v89
      %vm91 = vcmp.ge.f32.partialorder %v90, 1e-12
      %v92 = vsel %vm91, %v90, 1e-12
      %vm93 = vcmp.le.f32.partialorder %v92, 1.0
      %v94 = vsel %vm93, %v92, 1.0
      %v95 = vsub.f32 1.0, %v90
      %v96 = vmul.f32 %v95, %v95
      %v97 = vmul.f32 %v96, -0.36067376
      %v98 = vlog2.pop %v94
      %v99 = vmul.f32 %v98, 0.6931472
      %v100 = vmul.f32 %v97, %v99
      %v101 = vadd.f32 %v100, 0.0
      %v102 = vld [vmem:[#allocation7] sm:$0xff]
      %v103 = vadd.f32 %v102, %v101
      %104 = vst [vmem:[#allocation7] sm:$0xff] %v103
    $region25: #{tpu_custom_call.1} parent=1 // pred_fallthru
      _
    %p105 = scmp.gt.s32.totalorder %s79, 512
    // Predicated region
    $region26: #{tpu_custom_call.1} parent=1 // pred_check
      %p106 = pneg %p105
    $region27: #{tpu_custom_call.1} parent=1 // pred_check_branch
      %108 = sbr.rel (%p106) target = $region29
    $region28: #{tpu_custom_call.1} parent=1 // pred_region
      %v109 = vld [vmem:[#allocation2] sm:$0xff]
      %v110 = vld [vmem:[#allocation5] sm:$0xff]
      %v111 = vmul.f32 %v110, %v109
      %v112 = vsub.f32 1.0, %v110
      %v113 = vsub.f32 1.0, %v109
      %v114 = vmul.f32 %v112, %v113
      %v115 = vadd.f32 %v111, %v114
      %vm116 = vcmp.ge.f32.partialorder %v115, 1e-12
      %v117 = vsel %vm116, %v115, 1e-12
      %vm118 = vcmp.le.f32.partialorder %v117, 1.0
      %v119 = vsel %vm118, %v117, 1.0
      %v120 = vsub.f32 1.0, %v115
      %v121 = vmul.f32 %v120, %v120
      %v122 = vmul.f32 %v121, -0.36067376
      %v123 = vlog2.pop %v119
      %v124 = vmul.f32 %v123, 0.6931472
      %v125 = vmul.f32 %v122, %v124
      %s126 = ssub.s32 512, %s78
      %v127 = vlaneseq
      %v128 = vshrl.u32 %v127, 7
      %v129 = vlaneseq
      %v130 = vand.u32 %v129, 127
      %v131 = vmul.u32 %v128, 128
      %v132 = vadd.s32 %v131, %v130
      %v133 = vstv %s126
      %vm134 = vcmp.lt.s32.totalorder %v132, %v133
      %v135 = vsel %vm134, %v125, 0.0
      %v136 = vadd.f32 %v135, 0.0
      %v137 = vld [vmem:[#allocation7] sm:$0xff]
      %v138 = vadd.f32 %v137, %v136
      %139 = vst [vmem:[#allocation7] sm:$0xff] %v138
    $region29: #{tpu_custom_call.1} parent=1 // pred_fallthru
      _
    // Predicated region
    $region30: #{tpu_custom_call.1} parent=1 // pred_check
      _
    $region31: #{tpu_custom_call.1} parent=1 // pred_check_branch
      %141 = sbr.rel (0) target = $region33
    $region32: #{tpu_custom_call.1} parent=1 // pred_region
      %s143 = ssub.s32 128, 128
      %144 = vsyncadd [#allocation4], %s143
      %s146 = sshll.u32 [#allocation7], 4
      %s147 = int_to_ptr.vmem [resolvable:$true] %s146
      %149 = dma.vmem_to_hbm [thread:$0]  %s147, 128, %s2, [#allocation4]
    $region33: #{tpu_custom_call.1} parent=1 // pred_fallthru
      _
    // Predicated region
    $region34: #{tpu_custom_call.1} parent=1 // pred_check
      _
    $region35: #{tpu_custom_call.1} parent=1 // pred_check_branch
      %151 = sbr.rel (0) target = $region37
    $region36: #{tpu_custom_call.1} parent=1 // pred_region
      %152 = dma.done [#allocation4], 128
    $region37: #{tpu_custom_call.1} parent=1 // pred_fallthru
      _
    %153 = vsyncpa [#allocation3], 1
    %154 = vsyncpa [#allocation6], 1
    %155 = vsyncpa [#allocation4], 1

</llo_original>
